<compile_context>
chip_gen: v6e
topology: v6e:2x2x1
jax: 0.10.0
libtpu: 0.0.40
codegen_flags: <defaults>
</compile_context>

<pallas_src>
import jax
import jax.numpy as jnp
from jax.experimental import pallas as pl
from jax.experimental.pallas import tpu as pltpu


def _cdiv(a, b):
    return -(-a // b)


# ----------------------------- kernels -----------------------------

def _band_split_kernel_2d(w_ref, b_ref, x_ref, o_ref):
    # w_ref: (O, C)  fused band weights, VMEM-resident across the grid
    # b_ref: (O, 1)  fused bias (f32), resident
    # x_ref: (C, tT) one lane-dense T tile of one batch element
    # o_ref: (O, tT)
    y = jnp.dot(w_ref[...], x_ref[...], preferred_element_type=jnp.float32)  # MXU
    o_ref[...] = (y + b_ref[...]).astype(o_ref.dtype)


def _band_split_kernel_batched(w_ref, b_ref, x_ref, o_ref):
    # w_ref: (O, C); b_ref: (O, 1); x_ref: (bB, C, T); o_ref: (bB, O, T)
    # Small-T path: bB samples packed per step; short static unroll of 2-D MXU dots
    # (static leading-index views on the 3-D refs are free).
    for i in range(x_ref.shape[0]):
        y = jnp.dot(w_ref[...], x_ref[i], preferred_element_type=jnp.float32)
        o_ref[i] = (y + b_ref[...]).astype(o_ref.dtype)


# ----------------------------- tiling plan -----------------------------

def _vmem_plan():
    """Generation-aware (budget_bytes, vmem_limit_bytes-or-None)."""
    try:
        cap = getattr(pltpu.get_tpu_info(), "vmem_capacity_bytes", None)
    except Exception:
        cap = None
    if cap is None:
        # Conservative fallback: fits every generation's default scoped-VMEM limit.
        return 6 << 20, None
    if cap <= (64 << 20):
        # v7x: 64 MiB physical per TC (shared with whatever XLA keeps live).
        return 18 << 20, 28 << 20
    # v5e / v6e: 128 MiB physical VMEM; raise the scoped limit to allow big tiles.
    return 22 << 20, 32 << 20


# ----------------------------- wrapper -----------------------------

def multi_band_split(x, w_all, bias_all, num_bands, compute_dtype=jnp.bfloat16):
    """x: (B, C, T); w_all: (O, C); bias_all: (O,). Returns (B, num_bands, C//num_bands, T)
    in `compute_dtype` (bf16 by default; f32 MXU accumulation either way)."""
    B, C, T = x.shape
    O = w_all.shape[0]
    c_out = O // num_bands

    budget, vmem_limit = _vmem_plan()

    x_c = x.astype(compute_dtype)
    w_c = w_all.astype(compute_dtype)
    bias_col = bias_all.astype(jnp.float32).reshape(O, 1)

    isz = jnp.dtype(compute_dtype).itemsize
    # Double-buffered resident weight + bias blocks come out of the budget first.
    weight_bytes = 2 * (O * C * isz + O * 4)
    budget_io = max(budget - weight_bytes, 1 << 20)

    cost = pl.CostEstimate(
        flops=2 * B * O * C * T,
        transcendentals=0,
        bytes_accessed=isz * (B * C * T + B * O * T + O * C) + 4 * O,
    )

    min_steps = 2  # keep both v7x TensorCores fed when the problem allows

    if T >= 512:
        # ---- lane-tiled path: grid (B, nT), squeezed batch, lane-dense (O, tT) stores ----
        per_lane_db = 2 * (C + O) * isz                       # x2 for double buffering
        tT = max(128, (budget_io // per_lane_db) // 128 * 128)  # no hard cap: budget-driven
        if T <= tT:
            tT = T
        if B * _cdiv(T, tT) < min_steps and T >= 256:
            want_nt = _cdiv(min_steps, B)
            tT = max(128, _cdiv(_cdiv(T, 128), want_nt) * 128)
        nT = _cdiv(T, tT)

        out = pl.pallas_call(
            _band_split_kernel_2d,
            out_shape=jax.ShapeDtypeStruct((B, O, T), compute_dtype),
            grid_spec=pltpu.PrefetchScalarGridSpec(
                num_scalar_prefetch=0,
                grid=(B, nT),
                in_specs=[
                    pl.BlockSpec((O, C), lambda b, t: (0, 0)),   # weights, resident
                    pl.BlockSpec((O, 1), lambda b, t: (0, 0)),   # bias, resident
                    pl.BlockSpec((pl.Squeezed(), C, tT), lambda b, t: (b, 0, t)),
                ],
                out_specs=pl.BlockSpec((pl.Squeezed(), O, tT), lambda b, t: (b, 0, t)),
            ),
            compiler_params=pltpu.CompilerParams(
                dimension_semantics=("parallel", "parallel"),
                vmem_limit_bytes=vmem_limit,
            ),
            cost_estimate=cost,
        )(w_c, bias_col, x_c)
    else:
        # ---- small-T path: pack batch elements per step for large, lane-dense DMAs ----
        per_batch_db = 2 * (C + O) * T * isz                   # x2 for double buffering
        bB = max(1, budget_io // per_batch_db)
        bB = min(bB, 16)                                       # bound static unroll length
        if B >= 2:
            bB = min(bB, _cdiv(B, min_steps))                  # >=2 grid steps for v7x
        bB = max(1, min(bB, B))
        nB = _cdiv(B, bB)

        out = pl.pallas_call(
            _band_split_kernel_batched,
            out_shape=jax.ShapeDtypeStruct((B, O, T), compute_dtype),
            grid_spec=pltpu.PrefetchScalarGridSpec(
                num_scalar_prefetch=0,
                grid=(nB,),
                in_specs=[
                    pl.BlockSpec((O, C), lambda b: (0, 0)),
                    pl.BlockSpec((O, 1), lambda b: (0, 0)),
                    pl.BlockSpec((bB, C, T), lambda b: (b, 0, 0)),
                ],
                out_specs=pl.BlockSpec((bB, O, T), lambda b: (b, 0, 0)),
            ),
            compiler_params=pltpu.CompilerParams(
                dimension_semantics=("parallel",),
                vmem_limit_bytes=vmem_limit,
            ),
            cost_estimate=cost,
        )(w_c, bias_col, x_c)

    return out.reshape(B, num_bands, c_out, T)


# ----------------------------- params (matches torch weight_norm(dim=0)) -----------------------------

def init_params(key, channels, num_bands):
    """Deterministic weight_norm Conv1d(k=1) parameters, fused across bands.
    Effective weight = g * v / ||v||_2 (norm over (in_ch, k) per output channel)."""
    c_out = channels // num_bands
    ws, bs = [], []
    for i in range(num_bands):
        k1, k2, k3, key = jax.random.split(jax.random.fold_in(key, i), 4)
        v = jax.random.normal(k1, (c_out, channels, 1), dtype=jnp.float32) * 0.1
        g = jax.random.uniform(k2, (c_out, 1, 1), dtype=jnp.float32, minval=0.5, maxval=1.5)
        b = jax.random.normal(k3, (c_out,), dtype=jnp.float32) * 0.01
        v_norm = jnp.sqrt(jnp.sum(v * v, axis=(1, 2), keepdims=True))
        w_eff = (g * v / v_norm)[:, :, 0]                      # (c_out, C)
        ws.append(w_eff)
        bs.append(b)
    return jnp.concatenate(ws, axis=0), jnp.concatenate(bs, axis=0)


def _reference(x, w_all, bias_all, num_bands, compute_dtype):
    """Pure-JAX reference of the PyTorch forward, with matching input/weight rounding."""
    B, C, T = x.shape
    O = w_all.shape[0]
    c_out = O // num_bands
    xb = x.astype(compute_dtype)
    wb = w_all.astype(compute_dtype)
    y = jnp.einsum('oc,bct->bot', wb, xb, preferred_element_type=jnp.float32)
    y = y + bias_all[None, :, None]
    return y.reshape(B, num_bands, c_out, T)


if __name__ == "__main__":
    num_bands = 4
    channels = 16
    key = jax.random.PRNGKey(0)
    kx1, kx2, kp = jax.random.split(key, 3)
    w_all, bias_all = init_params(kp, channels, num_bands)
    c_out = channels // num_bands

    # Case 1: small-T / batched path (B=2, T=128).
    B1, T1 = 2, 128
    x1 = jax.random.normal(kx1, (B1, channels, T1), dtype=jnp.float32)
    out1 = jax.block_until_ready(multi_band_split(x1, w_all, bias_all, num_bands))
    ref1 = _reference(x1, w_all, bias_all, num_bands, jnp.bfloat16)
    assert out1.shape == (B1, num_bands, c_out, T1), out1.shape
    assert jnp.allclose(out1.astype(jnp.float32), ref1, atol=2e-2, rtol=2e-2), "case1 mismatch"

    # Case 2: lane-tiled path (B=1, T=2048) — exercises the squeezed-batch 2-D kernel
    # and the >=2-grid-step guarantee.
    B2, T2 = 1, 2048
    x2 = jax.random.normal(kx2, (B2, channels, T2), dtype=jnp.float32)
    out2 = jax.block_until_ready(multi_band_split(x2, w_all, bias_all, num_bands))
    ref2 = _reference(x2, w_all, bias_all, num_bands, jnp.bfloat16)
    assert out2.shape == (B2, num_bands, c_out, T2), out2.shape
    assert jnp.allclose(out2.astype(jnp.float32), ref2, atol=2e-2, rtol=2e-2), "case2 mismatch"

    print("KERNEL_OK")
</pallas_src>

<mosaic_0001>
module attributes {stable_mosaic.version = 11 : i64} {
  func.func @_band_split_kernel_batched(%arg0: i32, %arg1: memref<16x16xbf16, #tpu.memory_space<vmem>>, %arg2: memref<16x1xf32, #tpu.memory_space<vmem>>, %arg3: memref<1x16x128xbf16, #tpu.memory_space<vmem>>, %arg4: memref<1x16x128xbf16, #tpu.memory_space<vmem>>) attributes {dimension_semantics = [#tpu.dimension_semantics<parallel>], iteration_bounds = array<i64: 2>, scalar_prefetch = 0 : i64, scratch_operands = 0 : i64, tpu.core_type = #tpu.core_type<tc>, window_params = [{pipeline_mode = #tpu.pipeline_mode<synchronous>, transform_indices = @transform_0, window_bounds = array<i64: 16, 16>}, {pipeline_mode = #tpu.pipeline_mode<synchronous>, transform_indices = @transform_1, window_bounds = array<i64: 16, 1>}, {transform_indices = @transform_2, window_bounds = array<i64: 1, 16, 128>}, {transform_indices = @transform_3, window_bounds = array<i64: 1, 16, 128>}]} {
    %c0 = arith.constant 0 : index
    %c0_0 = arith.constant 0 : index
    %0 = vector.load %arg1[%c0, %c0_0] : memref<16x16xbf16, #tpu.memory_space<vmem>>, vector<16x16xbf16>
    %c0_1 = arith.constant 0 : index
    %c0_2 = arith.constant 0 : index
    %c0_3 = arith.constant 0 : index
    %1 = vector.load %arg3[%c0_1, %c0_2, %c0_3] : memref<1x16x128xbf16, #tpu.memory_space<vmem>>, vector<1x16x128xbf16>
    %2 = vector.shape_cast %1 : vector<1x16x128xbf16> to vector<16x128xbf16>
    %cst = arith.constant dense<0.000000e+00> : vector<16x128xf32>
    %3 = tpu.matmul %0, %2, %cst {dimension_numbers = #tpu.dot_dimension_numbers<[1], [0], [0], [1], [0, 0, 1, 1], [], []>} : vector<16x16xbf16>, vector<16x128xbf16>, vector<16x128xf32> -> vector<16x128xf32>
    %c0_4 = arith.constant 0 : index
    %c0_5 = arith.constant 0 : index
    %4 = vector.load %arg2[%c0_4, %c0_5] : memref<16x1xf32, #tpu.memory_space<vmem>>, vector<16x1xf32>
    %5 = vector.broadcast %4 : vector<16x1xf32> to vector<16x128xf32>
    %6 = arith.addf %3, %5 : vector<16x128xf32>
    %7 = arith.truncf %6 : vector<16x128xf32> to vector<16x128xbf16>
    %c0_6 = arith.constant 0 : index
    %c0_7 = arith.constant 0 : index
    %c0_8 = arith.constant 0 : index
    %8 = vector.load %arg4[%c0_6, %c0_7, %c0_8] : memref<1x16x128xbf16, #tpu.memory_space<vmem>>, vector<1x16x128xbf16>
    %9 = vector.shape_cast %8 : vector<1x16x128xbf16> to vector<16x128xbf16>
    %10 = vector.shape_cast %7 : vector<16x128xbf16> to vector<1x16x128xbf16>
    tpu.vector_store %arg4[%c0_6, %c0_7, %c0_8], %10 {strides = array<i32>} : memref<1x16x128xbf16, #tpu.memory_space<vmem>>, vector<1x16x128xbf16>,
    return
  }
  func.func @transform_0(%arg0: i32) -> (i32, i32) {
    %c0_i32 = arith.constant 0 : i32
    %c0_i32_0 = arith.constant 0 : i32
    %c0_i32_1 = arith.constant 0 : i32
    return %c0_i32, %c0_i32_0 : i32, i32
  }
  func.func @transform_1(%arg0: i32) -> (i32, i32) {
    %c0_i32 = arith.constant 0 : i32
    %c0_i32_0 = arith.constant 0 : i32
    %c0_i32_1 = arith.constant 0 : i32
    return %c0_i32, %c0_i32_0 : i32, i32
  }
  func.func @transform_2(%arg0: i32) -> (i32, i32, i32) {
    %c0_i32 = arith.constant 0 : i32
    %c0_i32_0 = arith.constant 0 : i32
    %c0_i32_1 = arith.constant 0 : i32
    return %arg0, %c0_i32, %c0_i32_0 : i32, i32, i32
  }
  func.func @transform_3(%arg0: i32) -> (i32, i32, i32) {
    %c0_i32 = arith.constant 0 : i32
    %c0_i32_0 = arith.constant 0 : i32
    %c0_i32_1 = arith.constant 0 : i32
    return %arg0, %c0_i32, %c0_i32_0 : i32, i32, i32
  }
}

</mosaic_0001>

<llo_original>
// kernel: tpu_custom_call.1
$region0: #{tpu_custom_call.1}
  #allocation0 [shape = 'u32[]', space=smem, size = 0x4, offset = 0x4, fixed_abs, tag = 'smem constant byte address 0x4 - core index']
  #allocation1 [shape = 'u32[144,128]{1,0:T(1,128)}', space=vmem, size = 0x12000, scoped, tag = 'internal scratch']
  %s0 = inlined_call_operand.hbm [shape: bf16[16,16], index: 0, kind: input, shape index: {}]
  %s1 = inlined_call_operand.vmem [shape: f32[16,1], index: 1, kind: input, shape index: {}]
  %s2 = inlined_call_operand.vmem [shape: bf16[2,16,128], index: 2, kind: input, shape index: {}]
  %s3 = inlined_call_operand.hbm [shape: bf16[2,16,128], index: 3, kind: output, shape index: {}]
  %s4 = sld [smem:[#allocation0]]
  $region49: #{tpu_custom_call.1} parent=0
    _
  %s6 = ssub.s32 1, %s4
  %s7 = scalar_select 0, %s6, %s4
  $region1: #{tpu_custom_call.1} parent=0
    #allocation2 [shape = 'u8[4096]{0}', space=vmem, size = 0x1000, scoped, tag = 'input window, operand 0, single buffered']
    #allocation3 [shape = 's32[2]{0}', space=sflag, size = 0x8, scoped, tag = 'scoped memory for tpu_custom_call.1']
    #allocation4 [shape = 's32[2]{0}', space=sflag, size = 0x8, scoped, tag = 'scoped memory for tpu_custom_call.1']
    #allocation5 [shape = 'u8[8192]{0}', space=vmem, size = 0x2000, scoped, tag = 'output window, operand 0']
    %8 = vsyncpa [#allocation3], 0
    %9 = vsyncpa [#allocation4], 0
    %s10 = scalar_lea.sflag [#allocation4], 1
    %11 = vsyncpa %s10, 0
    loop: start=0, step=1, limit=4
    $region2: #{tpu_custom_call.1} parent=1 // loop_pre_header
      _
    $region3: #{tpu_custom_call.1} parent=1 // loop_header
      %s13 = sphi 0, %s17
      %p14 = scmp.ge.s32.totalorder %s13, 4
      %s21 = sphi 0, %s21
      %s23 = sphi 0, %s21
      %s24 = sphi 0, %s23
      %s38 = sphi 0, %s24
      %s42 = sphi 0, %s42
      %s44 = sphi 0, %s42
      %s45 = sphi 0, %s44
      %s59 = sphi 0, %s45
      %s65 = sphi 0, %s67
      %s68 = sphi 0, %s65
      %s69 = sphi 0, %s68
      %s85 = sphi 0, %s69
      %s91 = sphi 0, %s93
      %s94 = sphi 0, %s91
      %s95 = sphi 0, %s94
      %s111 = sphi 0, %s95
    $region4: #{tpu_custom_call.1} parent=1 // loop_header_branch
      %16 = sbr.rel (%p14) target = $region8
    $region5: #{tpu_custom_call.1} parent=1 // loop_body
      %s18 = ssub.s32 %s13, 1
      %s19 = ssub.s32 %s13, 2
      %s20 = sadd.s32 %s13, 1
      %s22 = sadd.s32 %s21, 1
      %p25 = scmp.eq.s32.totalorder %s13, 1
      %p26 = scmp.ne.s32.totalorder %s21, %s23
      %p27 = scmp.eq.s32.totalorder %s13, 0
      %p28 = por %p26, %p27
      %p29 = scmp.ne.s32.totalorder %s21, %s23
      %p30 = scmp.eq.s32.totalorder %s18, 1
      %p31 = por %p29, %p30
      %p32 = scmp.ne.s32.totalorder %s23, %s24
      %p33 = scmp.eq.s32.totalorder %s18, 0
      %p34 = por %p32, %p33
      %p35 = scmp.ne.s32.totalorder %s23, %s24
      %p36 = scmp.eq.s32.totalorder %s19, 1
      %p37 = por %p35, %p36
      %p39 = scmp.ne.s32.totalorder %s24, %s38
      %p40 = scmp.eq.s32.totalorder %s19, 0
      %p41 = por %p39, %p40
      %s43 = sadd.s32 %s42, 1
      %p46 = scmp.eq.s32.totalorder %s13, 1
      %p47 = scmp.ne.s32.totalorder %s42, %s44
      %p48 = scmp.eq.s32.totalorder %s13, 0
      %p49 = por %p47, %p48
      %p50 = scmp.ne.s32.totalorder %s42, %s44
      %p51 = scmp.eq.s32.totalorder %s18, 1
      %p52 = por %p50, %p51
      %p53 = scmp.ne.s32.totalorder %s44, %s45
      %p54 = scmp.eq.s32.totalorder %s18, 0
      %p55 = por %p53, %p54
      %p56 = scmp.ne.s32.totalorder %s44, %s45
      %p57 = scmp.eq.s32.totalorder %s19, 1
      %p58 = por %p56, %p57
      %p60 = scmp.ne.s32.totalorder %s45, %s59
      %p61 = scmp.eq.s32.totalorder %s19, 0
      %p62 = por %p60, %p61
      %s63 = ssub.s32 %s13, %s20
      %p64 = scmp.eq.s32.totalorder %s63, 0
      %s66 = sadd.s32 %s65, 1
      %s67 = scalar_select %p64, %s65, %s66
      %p70 = pneg %p64
      %p71 = scmp.eq.s32.totalorder %s13, 1
      %p72 = por %p70, %p71
      %p73 = scmp.ne.s32.totalorder %s65, %s68
      %p74 = scmp.eq.s32.totalorder %s13, 0
      %p75 = por %p73, %p74
      %p76 = scmp.ne.s32.totalorder %s65, %s68
      %p77 = scmp.eq.s32.totalorder %s18, 1
      %p78 = por %p76, %p77
      %p79 = scmp.ne.s32.totalorder %s68, %s69
      %p80 = scmp.eq.s32.totalorder %s18, 0
      %p81 = por %p79, %p80
      %p82 = scmp.ne.s32.totalorder %s68, %s69
      %p83 = scmp.eq.s32.totalorder %s19, 1
      %p84 = por %p82, %p83
      %p86 = scmp.ne.s32.totalorder %s69, %s85
      %p87 = scmp.eq.s32.totalorder %s19, 0
      %p88 = por %p86, %p87
      %s89 = ssub.s32 %s13, %s20
      %p90 = scmp.eq.s32.totalorder %s89, 0
      %s92 = sadd.s32 %s91, 1
      %s93 = scalar_select %p90, %s91, %s92
      %p96 = pneg %p90
      %p97 = scmp.eq.s32.totalorder %s13, 1
      %p98 = por %p96, %p97
      %p99 = scmp.ne.s32.totalorder %s91, %s94
      %p100 = scmp.eq.s32.totalorder %s13, 0
      %p101 = por %p99, %p100
      %p102 = scmp.ne.s32.totalorder %s91, %s94
      %p103 = scmp.eq.s32.totalorder %s18, 1
      %p104 = por %p102, %p103
      %p105 = scmp.ne.s32.totalorder %s94, %s95
      %p106 = scmp.eq.s32.totalorder %s18, 0
      %p107 = por %p105, %p106
      %p108 = scmp.ne.s32.totalorder %s94, %s95
      %p109 = scmp.eq.s32.totalorder %s19, 1
      %p110 = por %p108, %p109
      %p112 = scmp.ne.s32.totalorder %s95, %s111
      %p113 = scmp.eq.s32.totalorder %s19, 0
      %p114 = por %p112, %p113
      %p115 = scmp.le.s32.totalorder 1, %s13
      %p116 = scmp.lt.s32.totalorder %s13, 3
      %p117 = pnand %p115, %p116
      %p118 = pneg %p117
      // Predicated region
      $region9: #{tpu_custom_call.1} parent=5 // pred_check
        _
      $region10: #{tpu_custom_call.1} parent=5 // pred_check_branch
        %120 = sbr.rel (%p117) target = $region12
      $region11: #{tpu_custom_call.1} parent=5 // pred_region
        %s121 = ssub.s32 %s13, 1
        // Predicated region
        $region13: #{tpu_custom_call.1} parent=11 // pred_check
          %p122 = pneg %p34
        $region14: #{tpu_custom_call.1} parent=11 // pred_check_branch
          %124 = sbr.rel (%p122) target = $region16
        $region15: #{tpu_custom_call.1} parent=11 // pred_region
          %s126 = ssub.s32 128, 128
          %127 = vsyncadd [#allocation3], %s126
          %s128 = sshll.u32 [#allocation2], 4
          %s129 = int_to_ptr.vmem [resolvable:$true] %s128
          %134 = dma.hbm_to_vmem [thread:$0]  %s0, 128, %s129, [#allocation3], 64, 64, 4
        $region16: #{tpu_custom_call.1} parent=11 // pred_fallthru
          _
        // Predicated region
        $region17: #{tpu_custom_call.1} parent=11 // pred_check
          %p135 = pneg %p55
        $region18: #{tpu_custom_call.1} parent=11 // pred_check_branch
          %137 = sbr.rel (%p135) target = $region20
        $region19: #{tpu_custom_call.1} parent=11 // pred_region
          _
        $region20: #{tpu_custom_call.1} parent=11 // pred_fallthru
          _
      $region12: #{tpu_custom_call.1} parent=5 // pred_fallthru
        _
      %p138 = scmp.lt.s32.totalorder %s13, 2
      // Predicated region
      $region21: #{tpu_custom_call.1} parent=5 // pred_check
        %p139 = pneg %p138
      $region22: #{tpu_custom_call.1} parent=5 // pred_check_branch
        %141 = sbr.rel (%p139) target = $region24
      $region23: #{tpu_custom_call.1} parent=5 // pred_region
        // Predicated region
        $region25: #{tpu_custom_call.1} parent=23 // pred_check
          %p142 = pneg %p75
        $region26: #{tpu_custom_call.1} parent=23 // pred_check_branch
          %144 = sbr.rel (%p142) target = $region28
        $region27: #{tpu_custom_call.1} parent=23 // pred_region
          %p145 = scmp.lt.s32.totalorder %s13, 1
          %s146 = scalar_select %p145, %s13, 1
          %s147 = smul.addr %s146, 2
          %s148 = smul.addr %s147, 4
          %s149 = scalar_lea.vmem %s2, %s148
        $region28: #{tpu_custom_call.1} parent=23 // pred_fallthru
          _
      $region24: #{tpu_custom_call.1} parent=5 // pred_fallthru
        _
      %p150 = scmp.le.s32.totalorder 1, %s13
      %p151 = scmp.lt.s32.totalorder %s13, 3
      %p152 = pnand %p150, %p151
      %p153 = pneg %p152
      // Predicated region
      $region29: #{tpu_custom_call.1} parent=5 // pred_check
        _
      $region30: #{tpu_custom_call.1} parent=5 // pred_check_branch
        %155 = sbr.rel (%p152) target = $region32
      $region31: #{tpu_custom_call.1} parent=5 // pred_region
        %s156 = ssub.s32 %s13, 1
        // Predicated region
        $region33: #{tpu_custom_call.1} parent=31 // pred_check
          %p157 = pneg %p34
        $region34: #{tpu_custom_call.1} parent=31 // pred_check_branch
          %159 = sbr.rel (%p157) target = $region36
        $region35: #{tpu_custom_call.1} parent=31 // pred_region
          %160 = dma.done [#allocation3], 128
        $region36: #{tpu_custom_call.1} parent=31 // pred_fallthru
          _
        %p161 = pneg %p34
        %p162 = pneg %p31
        %p163 = pneg %p55
        %p164 = pneg %p52
        %p165 = scmp.lt.s32.totalorder %s18, 1
        %s166 = scalar_select %p165, %s18, 1
        %s167 = smul.addr %s166, 2
        %s168 = smul.addr %s167, 4
        %s169 = scalar_lea.vmem %s2, %s168
        %p170 = pneg %p81
        %p171 = pneg %p78
        %p172 = pneg %p107
        %p173 = pneg %p104
        %s174 = sand.u32 %s94, 1
        %s175 = scalar_lea.sflag [#allocation4], %s174
        %s176 = sand.u32 %s94, 1
        %s177 = smul.addr %s176, 8
        %s178 = scalar_lea.vmem [#allocation5], %s177
        %p179 = scmp.lt.s32.totalorder %s18, 1
        %s180 = scalar_select %p179, %s18, 1
        %s181 = smul.addr %s180, 2
        %s182 = smul.addr %s181, 4
        %s183 = scalar_lea.vmem %s2, %s182
        %v185 = vld [vmem:[#allocation2] sm:$0xf]
        %v186 = vld [vmem:[#allocation2 + $0x4] sm:$0xf]
        %v187 = vld [vmem:[%s183] sm:$0xf]
        %v188 = vld [vmem:[%s183 + $0x4] sm:$0xf]
        %v189 = vld [vmem:[%s1] sm:$0xff]
        %v190 = vld [vmem:[%s1 + $0x8] sm:$0xff]
        %192 = vset.pattern.permute.xlu0 0
        %193 = vperm.xlu0 %192, %v189
        %v194 = vpop.permute.xlu0 %193
        %197 = vset.pattern.permute.xlu0 0
        %198 = vperm.xlu0 %197, %v190
        %v199 = vpop.permute.xlu0 %198
        %v203 = vunpack.c.l.b16 %v185
        %v204 = vunpack.c.l.b16 %v186
        %v205 = vpack.c.b16 %v204, %v203
        %v208 = vunpack.c.l.b16 %v187
        %v209 = vunpack.c.l.b16 %v188
        %v210 = vpack.c.b16 %v209, %v208
        %vm212 = vcmask 130048
        %v214 = vsel %vm212, %v205, 0
        %216 = vmatprep.subr.bf16.mxu0 0
        %217 = vmatpush1.bf16.msra.mxu0 0
        %218 = vmatprep.subr.bf16.mxu0 0
        %219 = vmatpush1.bf16.msra.mxu0 0
        %220 = vmatprep.subr.bf16.mxu0 0
        %221 = vmatpush1.bf16.msra.mxu0 0
        %222 = vmatprep.subr.bf16.mxu0 0
        %223 = vmatpush1.bf16.msra.mxu0 0
        %224 = vmatprep.subr.bf16.mxu0 0
        %225 = vmatpush1.bf16.msra.mxu0 0
        %226 = vmatprep.subr.bf16.mxu0 0
        %227 = vmatpush1.bf16.msra.mxu0 0
        %228 = vmatprep.subr.bf16.mxu0 0
        %229 = vmatpush1.bf16.msra.mxu0 0
        %230 = vmatprep.subr.bf16.mxu0 0
        %231 = vmatpush1.bf16.msra.mxu0 %v210
        %232 = vmatprep.subr.bf16.mxu0 0
        %233 = vmatpush2.bf16.msra.mxu0 0
        %234 = vmatprep.subr.bf16.mxu0 0
        %235 = vmatpush2.bf16.msra.mxu0 0
        %236 = vmatprep.subr.bf16.mxu0 0
        %237 = vmatpush2.bf16.msra.mxu0 0
        %238 = vmatprep.subr.bf16.mxu0 0
        %239 = vmatpush2.bf16.msra.mxu0 0
        %240 = vmatprep.subr.bf16.mxu0 0
        %241 = vmatpush2.bf16.msra.mxu0 0
        %242 = vmatprep.subr.bf16.mxu0 0
        %243 = vmatpush2.bf16.msra.mxu0 0
        %244 = vmatprep.subr.bf16.mxu0 0
        %245 = vmatpush2.bf16.msra.mxu0 0
        %246 = vmatprep.subr.bf16.mxu0 0
        %247 = vmatpush2.bf16.msra.mxu0 0
        %248 = vmatprep.mubr.bf16.mxu0 0
        %249 = vmatmul.mubr.bf16.gmra.mxu0 %v214
        %v250 = vpop.f32.mrf.mxu0
        %v251 = vadd.f32 %v194, %v250
        %v252 = vpop.f32.mrf.mxu0
        %v253 = vpop.f32.mrf.mxu0
        %v254 = vadd.f32 %v199, %v253
        %v255 = vpop.f32.mrf.mxu0
        %256 = vdwg.mxu0
        %v257 = vpack.c.bf16 %v254, %v251
        %v259 = vunpack.c.l.b16 %v257
        %v260 = vunpack.c.h.b16 %v257
        %v261 = vpack.c.b16 %v259, %v259
        %v262 = vpack.c.b16 %v260, %v260
        %265 = vst [vmem:[%s178] sm:$0xf] %v261
        %266 = vst [vmem:[%s178 + $0x4] sm:$0xf] %v262
        %s267 = sand.u32 %s94, 1
        %s268 = scalar_lea.sflag [#allocation4], %s267
        %s269 = sand.u32 %s94, 1
        %s270 = smul.addr %s269, 8
        %s271 = scalar_lea.vmem [#allocation5], %s270
        // Predicated region
        $region37: #{tpu_custom_call.1} parent=31 // pred_check
          %p272 = pneg %p104
        $region38: #{tpu_custom_call.1} parent=31 // pred_check_branch
          %274 = sbr.rel (%p272) target = $region40
        $region39: #{tpu_custom_call.1} parent=31 // pred_region
          %s276 = ssub.s32 128, 128
          %277 = vsyncadd %s268, %s276
          %s278 = smul.addr %s18, 2
          %s279 = smul.addr %s278, 64
          %s280 = scalar_lea.hbm %s3, %s279
          %s281 = sshll.u32 %s271, 4
          %s282 = int_to_ptr.vmem [resolvable:$true] %s281
          %287 = dma.vmem_to_hbm [thread:$0]  %s282, 128, %s280, %s268, 64, 64, 4
        $region40: #{tpu_custom_call.1} parent=31 // pred_fallthru
          _
      $region32: #{tpu_custom_call.1} parent=5 // pred_fallthru
        _
      %p288 = scmp.le.s32.totalorder 2, %s13
      // Predicated region
      $region41: #{tpu_custom_call.1} parent=5 // pred_check
        %p289 = pneg %p288
      $region42: #{tpu_custom_call.1} parent=5 // pred_check_branch
        %291 = sbr.rel (%p289) target = $region44
      $region43: #{tpu_custom_call.1} parent=5 // pred_region
        %s292 = ssub.s32 %s13, 2
        // Predicated region
        $region45: #{tpu_custom_call.1} parent=43 // pred_check
          %p293 = pneg %p110
        $region46: #{tpu_custom_call.1} parent=43 // pred_check_branch
          %295 = sbr.rel (%p293) target = $region48
        $region47: #{tpu_custom_call.1} parent=43 // pred_region
          %s296 = sand.u32 %s95, 1
          %s297 = scalar_lea.sflag [#allocation4], %s296
          %s298 = sand.u32 %s95, 1
          %s299 = smul.addr %s298, 8
          %s300 = scalar_lea.vmem [#allocation5], %s299
          %301 = dma.done %s297, 128
        $region48: #{tpu_custom_call.1} parent=43 // pred_fallthru
          _
      $region44: #{tpu_custom_call.1} parent=5 // pred_fallthru
        _
    $region6: #{tpu_custom_call.1} parent=1 // loop_footer
      %s17 = sadd.s32 1, %s13
    $region7: #{tpu_custom_call.1} parent=1 // loop_footer_branch
      %12 = sbr.rel target = $region3
    $region8: #{tpu_custom_call.1} parent=1 // loop_exit
      _
    %302 = vsyncpa [#allocation3], 1
    %s303 = scalar_lea.sflag [#allocation3], 1
    %304 = vsyncpa %s303, 1
    %305 = vsyncpa [#allocation4], 1
    %s306 = scalar_lea.sflag [#allocation4], 1
    %307 = vsyncpa %s306, 1

</llo_original>
